<compile_context>
chip_gen: v7x
topology: tpu7x:2x2x1
jax: 0.10.0
libtpu: 0.0.40
codegen_flags: <defaults>
</compile_context>

<pallas_src>
import functools

import jax
import jax.numpy as jnp
from jax.experimental import pallas as pl
from jax.experimental.pallas import tpu as pltpu

LANES = 128
SUBLANES = 8


def _round_up(x, m):
    return ((x + m - 1) // m) * m


def _tile_sum(a, block_s):
    # (block_s, 128) -> (8, 128) partial sum, staying (8,128)-aligned:
    # pure vreg-wise VPU adds over the leading axis, no cross-sublane XLU work.
    return jnp.sum(a.reshape(block_s // SUBLANES, SUBLANES, LANES), axis=0)


def _soft_iou_kernel(x_ref, t_ref, out_ref, *, n_classes, block_s,
                     mask_logits, mask_softmax, bf16_math):
    # x_ref:   (1, C, block_s, 128)   logits tile, native dtype
    # t_ref:   (1, 1, block_s, 128)   int8/int32 class ids; -1 marks padding
    # out_ref: (1, 1, 3, C, 8, 128)   f32 accumulator resident across the inner
    #                                 (reduction) grid axis:
    #                                 plane 0 = inter, 1 = sum_pred, 2 = count
    ki = pl.program_id(2)

    @pl.when(ki == 0)
    def _():
        out_ref[...] = jnp.zeros_like(out_ref)

    t = t_ref[0, 0].astype(jnp.int32)            # on-chip upcast of int8 stream
    valid = t >= 0                               # (block_s, 128) bool

    cdt = x_ref.dtype if bf16_math else jnp.float32
    zero = jnp.zeros((), cdt)

    # --- channel softmax over dense (block_s, 128) slabs ----------------------
    xs = []
    for c in range(n_classes):
        xc = x_ref[0, c].astype(cdt)
        if mask_logits:
            # Ragged last tile: OOB logits reads are unspecified -> mask before
            # max/exp so garbage (inf/NaN) can never reach the accumulator.
            xc = jnp.where(valid, xc, zero)
        xs.append(xc)

    m = xs[0]
    for c in range(1, n_classes):
        m = jnp.maximum(m, xs[c])

    # TODO(synk): for very large C, recompute exp(x_c - m) inside the reduction
    # loop instead of keeping all C slabs live (decide from the bundle dump).
    es = []
    denom = None
    for c in range(n_classes):
        e = jnp.exp(xs[c] - m).astype(jnp.float32)   # EUP; bf16 exp on v6e/v7x
        es.append(e)
        denom = e if denom is None else denom + e

    # One exact reciprocal per pixel (parity with torch) instead of C divides.
    inv = pl.reciprocal(denom)
    if mask_softmax:
        inv = jnp.where(valid, inv, 0.0)             # padded pixels contribute 0

    # --- per-class partial reductions for this tile ---------------------------
    for c in range(n_classes):
        pred_c = es[c] * inv                                     # (BS, 128) f32
        onehot_c = (t == c).astype(jnp.float32)                  # (BS, 128) f32
        out_ref[0, 0, 0, c] += _tile_sum(pred_c * onehot_c, block_s)
        out_ref[0, 0, 1, c] += _tile_sum(pred_c, block_s)
        out_ref[0, 0, 2, c] += _tile_sum(onehot_c, block_s)


def _vmem_need_bytes(block_s, n_classes, x_itemsize, t_itemsize):
    px = block_s * LANES
    io = 2 * (n_classes * px * x_itemsize + px * t_itemsize)   # 2x-buffered inputs
    acc = 2 * (3 * n_classes * SUBLANES * LANES * 4)           # 2x-buffered accumulator
    live = 3 * n_classes * px * 4                              # xs/es/pred temporaries
    return io + acc + live


def soft_iou_loss(logits, target, n_classes, *, block_s=512):
    """SoftIoULoss forward.  logits: (N, C, H, W) float; target: (N, H, W) int.

    block_s * 128 = pixels per HW tile.  Default 512 (~64K px); sweep upward
    (512-1024 on v7x, 512-2048 on v5e/v6e) — the auto VMEM check shrinks it
    only when the honest estimate exceeds ~3/4 of physical VMEM.
    """
    N, C, H, W = logits.shape
    assert C == n_classes
    HW = H * W

    # ---- logits: zero-copy reshape when HW % 128 == 0 (common case); else a
    #      minimal pad to the next multiple of 128 (required for the reshape).
    HW128 = _round_up(HW, LANES)
    S_total = HW128 // LANES
    x = logits.reshape(N, C, HW)
    if HW128 != HW:
        x = jnp.pad(x, ((0, 0), (0, 0), (0, HW128 - HW)))
    x = x.reshape(N, C, S_total, LANES)

    # ---- compact target stream: int8 when class ids fit (4x fewer HBM bytes).
    t_dtype = jnp.int8 if n_classes <= 127 else jnp.int32
    t_itemsize = jnp.dtype(t_dtype).itemsize
    x_itemsize = jnp.dtype(logits.dtype).itemsize

    # ---- tile size: multiple of 32 sublanes (int8 packing), clamped to the
    #      input and to an honest VMEM budget (I/O + live temporaries).
    block_s = max(32, (block_s // 32) * 32)
    block_s = min(block_s, _round_up(S_total, 32))
    try:
        vmem_cap = int(pltpu.get_tpu_info().vmem_capacity_bytes)
    except Exception:
        vmem_cap = 64 << 20                      # conservative: v7x physical
    vmem_budget = (vmem_cap * 3) // 4            # ~48 MiB v7x, ~96 MiB v5e/v6e
    while block_s > 32 and _vmem_need_bytes(block_s, C, x_itemsize, t_itemsize) > vmem_budget:
        block_s = max(32, ((block_s // 2) // 32) * 32)

    num_tiles = -(-S_total // block_s)

    # ---- keep both v7x TensorCores busy when N alone can't: split the HW-tile
    #      axis into (outer "parallel", inner "arbitrary") with a per-outer
    #      accumulator slot.  Only when it divides evenly (no fully-OOB tiles).
    n_outer = 2 if (N % 2 == 1 and num_tiles % 2 == 0) else 1
    n_inner = num_tiles // n_outer

    # ---- target: cheap pad (1 B/px) with -1 to the exact grid extent so the
    #      validity mask is defined on every tile; logits stay un-padded.
    S_grid = num_tiles * block_s
    t = target.reshape(N, HW).astype(t_dtype)
    if S_grid * LANES != HW:
        t = jnp.pad(t, ((0, 0), (0, S_grid * LANES - HW)), constant_values=-1)
    t = t.reshape(N, 1, S_grid, LANES)

    mask_logits = (num_tiles * block_s != S_total)   # ragged last logits tile
    mask_softmax = (S_grid * LANES != HW)            # any padded pixels at all
    bf16_math = logits.dtype == jnp.bfloat16

    kernel = functools.partial(
        _soft_iou_kernel, n_classes=C, block_s=block_s,
        mask_logits=mask_logits, mask_softmax=mask_softmax, bf16_math=bf16_math)

    vmem_limit = int(min(
        vmem_budget,
        max(_vmem_need_bytes(block_s, C, x_itemsize, t_itemsize) + (2 << 20),
            16 << 20)))

    parts = pl.pallas_call(
        kernel,
        out_shape=jax.ShapeDtypeStruct((N, n_outer, 3, C, SUBLANES, LANES),
                                       jnp.float32),
        grid=(N, n_outer, n_inner),
        in_specs=[
            pl.BlockSpec((1, C, block_s, LANES),
                         lambda n, ko, ki: (n, 0, ko * n_inner + ki, 0)),
            pl.BlockSpec((1, 1, block_s, LANES),
                         lambda n, ko, ki: (n, 0, ko * n_inner + ki, 0)),
        ],
        out_specs=pl.BlockSpec((1, 1, 3, C, SUBLANES, LANES),
                               lambda n, ko, ki: (n, ko, 0, 0, 0, 0)),
        compiler_params=pltpu.CompilerParams(
            dimension_semantics=("parallel", "parallel", "arbitrary"),
            vmem_limit_bytes=vmem_limit,
        ),
    )(x, t)

    # Tiny JAX epilogue: (N, n_outer, 3, C, 8, 128) partials -> per-class sums
    # -> ratio -> mean (O(N*C) work only).
    sums = jnp.sum(parts, axis=(1, 4, 5))            # (N, 3, C)
    inter = sums[:, 0]
    sum_pred = sums[:, 1]
    count = sums[:, 2]
    union = sum_pred + count - inter                 # pred + onehot - pred*onehot
    return -jnp.mean(inter / (union + 1e-16))


def _reference_soft_iou_loss(logits, target, n_classes):
    # Pure-JAX reference mirroring the PyTorch module.
    N, C, H, W = logits.shape
    pred = jax.nn.softmax(logits.astype(jnp.float32), axis=1)
    onehot = jax.nn.one_hot(target, n_classes, axis=1, dtype=jnp.float32)
    inter = (pred * onehot).reshape(N, C, -1).sum(2)
    union = (pred + onehot - pred * onehot).reshape(N, C, -1).sum(2)
    loss = inter / (union + 1e-16)
    return -loss.mean()


if __name__ == "__main__":
    key = jax.random.PRNGKey(0)

    # --- main test: f32 logits, exercises ragged-tile masking -----------------
    n_classes = 4
    N, H, W = 2, 16, 16
    k1, k2, k3, k4, k5 = jax.random.split(key, 5)
    logits = jax.random.normal(k1, (N, n_classes, H, W), dtype=jnp.float32)
    target = jax.random.randint(k2, (N, H, W), 0, n_classes, dtype=jnp.int32)

    loss = soft_iou_loss(logits, target, n_classes)
    jax.block_until_ready(loss)
    ref = _reference_soft_iou_loss(logits, target, n_classes)
    assert jnp.allclose(loss, ref, atol=1e-5, rtol=1e-5), (loss, ref)

    # --- N=1 test: exercises the (outer parallel, inner arbitrary) HW split ---
    logits2 = jax.random.normal(k3, (1, 3, 64, 128), dtype=jnp.float32)
    target2 = jax.random.randint(k4, (1, 64, 128), 0, 3, dtype=jnp.int32)
    loss2 = soft_iou_loss(logits2, target2, 3, block_s=32)
    jax.block_until_ready(loss2)
    ref2 = _reference_soft_iou_loss(logits2, target2, 3)
    assert jnp.allclose(loss2, ref2, atol=1e-5, rtol=1e-5), (loss2, ref2)

    # --- bf16 test: exercises the bf16 elementwise path (looser tolerance) ----
    logits3 = jax.random.normal(k5, (N, n_classes, H, W)).astype(jnp.bfloat16)
    loss3 = soft_iou_loss(logits3, target, n_classes)
    jax.block_until_ready(loss3)
    ref3 = _reference_soft_iou_loss(logits3, target, n_classes)
    assert jnp.allclose(loss3, ref3, atol=3e-2, rtol=3e-2), (loss3, ref3)

    print("KERNEL_OK")
</pallas_src>

<mosaic_0001>
module attributes {stable_mosaic.version = 11 : i64} {
  func.func @_soft_iou_kernel(%arg0: i32, %arg1: i32, %arg2: i32, %arg3: memref<1x4x32x128xf32, #tpu.memory_space<vmem>>, %arg4: memref<1x1x32x128xi8, #tpu.memory_space<vmem>>, %arg5: memref<1x1x3x4x8x128xf32, #tpu.memory_space<vmem>>) attributes {dimension_semantics = [#tpu.dimension_semantics<parallel>, #tpu.dimension_semantics<parallel>, #tpu.dimension_semantics<arbitrary>], iteration_bounds = array<i64: 2, 1, 1>, scalar_prefetch = 0 : i64, scratch_operands = 0 : i64, tpu.core_type = #tpu.core_type<tc>, window_params = [{transform_indices = @transform_0, window_bounds = array<i64: 1, 4, 32, 128>}, {transform_indices = @transform_1, window_bounds = array<i64: 1, 1, 32, 128>}, {transform_indices = @transform_2, window_bounds = array<i64: 1, 1, 3, 4, 8, 128>}]} {
    %c0_i32 = arith.constant 0 : i32
    %0 = arith.cmpi eq, %arg2, %c0_i32 : i32
    %1 = arith.extui %0 : i1 to i32
    %c0_i32_0 = arith.constant 0 : i32
    %2 = arith.cmpi ne, %1, %c0_i32_0 : i32
    scf.if %2 {
      %cst_179 = arith.constant 0.000000e+00 : f32
      %161 = vector.broadcast %cst_179 : f32 to vector<1x1x3x4x8x128xf32>
      %c0_180 = arith.constant 0 : index
      %c0_181 = arith.constant 0 : index
      %c0_182 = arith.constant 0 : index
      %c0_183 = arith.constant 0 : index
      %c0_184 = arith.constant 0 : index
      %c0_185 = arith.constant 0 : index
      %162 = vector.load %arg5[%c0_180, %c0_181, %c0_182, %c0_183, %c0_184, %c0_185] : memref<1x1x3x4x8x128xf32, #tpu.memory_space<vmem>>, vector<1x1x3x4x8x128xf32>
      tpu.vector_store %arg5[%c0_180, %c0_181, %c0_182, %c0_183, %c0_184, %c0_185], %161 {strides = array<i32>} : memref<1x1x3x4x8x128xf32, #tpu.memory_space<vmem>>, vector<1x1x3x4x8x128xf32>,
    } else {
    }
    %c0 = arith.constant 0 : index
    %c0_1 = arith.constant 0 : index
    %c0_2 = arith.constant 0 : index
    %c0_3 = arith.constant 0 : index
    %3 = vector.load %arg4[%c0, %c0_1, %c0_2, %c0_3] : memref<1x1x32x128xi8, #tpu.memory_space<vmem>>, vector<1x1x32x128xi8>
    %4 = vector.shape_cast %3 : vector<1x1x32x128xi8> to vector<32x128xi8>
    %5 = arith.extsi %4 : vector<32x128xi8> to vector<32x128xi32>
    %c0_i32_4 = arith.constant 0 : i32
    %6 = vector.broadcast %c0_i32_4 : i32 to vector<32x128xi32>
    %7 = arith.cmpi sge, %5, %6 : vector<32x128xi32>
    %c0_5 = arith.constant 0 : index
    %c0_6 = arith.constant 0 : index
    %c0_7 = arith.constant 0 : index
    %c0_8 = arith.constant 0 : index
    %8 = vector.load %arg3[%c0_5, %c0_6, %c0_7, %c0_8] : memref<1x4x32x128xf32, #tpu.memory_space<vmem>>, vector<1x1x32x128xf32>
    %9 = vector.shape_cast %8 : vector<1x1x32x128xf32> to vector<32x128xf32>
    %cst = arith.constant 0.000000e+00 : f32
    %10 = vector.broadcast %cst : f32 to vector<32x128xf32>
    %11 = arith.select %7, %9, %10 : vector<32x128xi1>, vector<32x128xf32>
    %c0_9 = arith.constant 0 : index
    %c1 = arith.constant 1 : index
    %c0_10 = arith.constant 0 : index
    %c0_11 = arith.constant 0 : index
    %12 = vector.load %arg3[%c0_9, %c1, %c0_10, %c0_11] : memref<1x4x32x128xf32, #tpu.memory_space<vmem>>, vector<1x1x32x128xf32>
    %13 = vector.shape_cast %12 : vector<1x1x32x128xf32> to vector<32x128xf32>
    %cst_12 = arith.constant 0.000000e+00 : f32
    %14 = vector.broadcast %cst_12 : f32 to vector<32x128xf32>
    %15 = arith.select %7, %13, %14 : vector<32x128xi1>, vector<32x128xf32>
    %c0_13 = arith.constant 0 : index
    %c2 = arith.constant 2 : index
    %c0_14 = arith.constant 0 : index
    %c0_15 = arith.constant 0 : index
    %16 = vector.load %arg3[%c0_13, %c2, %c0_14, %c0_15] : memref<1x4x32x128xf32, #tpu.memory_space<vmem>>, vector<1x1x32x128xf32>
    %17 = vector.shape_cast %16 : vector<1x1x32x128xf32> to vector<32x128xf32>
    %cst_16 = arith.constant 0.000000e+00 : f32
    %18 = vector.broadcast %cst_16 : f32 to vector<32x128xf32>
    %19 = arith.select %7, %17, %18 : vector<32x128xi1>, vector<32x128xf32>
    %c0_17 = arith.constant 0 : index
    %c3 = arith.constant 3 : index
    %c0_18 = arith.constant 0 : index
    %c0_19 = arith.constant 0 : index
    %20 = vector.load %arg3[%c0_17, %c3, %c0_18, %c0_19] : memref<1x4x32x128xf32, #tpu.memory_space<vmem>>, vector<1x1x32x128xf32>
    %21 = vector.shape_cast %20 : vector<1x1x32x128xf32> to vector<32x128xf32>
    %cst_20 = arith.constant 0.000000e+00 : f32
    %22 = vector.broadcast %cst_20 : f32 to vector<32x128xf32>
    %23 = arith.select %7, %21, %22 : vector<32x128xi1>, vector<32x128xf32>
    %24 = arith.maximumf %11, %15 : vector<32x128xf32>
    %25 = arith.maximumf %24, %19 : vector<32x128xf32>
    %26 = arith.maximumf %25, %23 : vector<32x128xf32>
    %27 = arith.subf %11, %26 : vector<32x128xf32>
    %28 = math.exp %27 : vector<32x128xf32>
    %29 = arith.subf %15, %26 : vector<32x128xf32>
    %30 = math.exp %29 : vector<32x128xf32>
    %31 = arith.addf %28, %30 : vector<32x128xf32>
    %32 = arith.subf %19, %26 : vector<32x128xf32>
    %33 = math.exp %32 : vector<32x128xf32>
    %34 = arith.addf %31, %33 : vector<32x128xf32>
    %35 = arith.subf %23, %26 : vector<32x128xf32>
    %36 = math.exp %35 : vector<32x128xf32>
    %37 = arith.addf %34, %36 : vector<32x128xf32>
    %38 = tpu.reciprocal %37 : vector<32x128xf32> -> vector<32x128xf32>
    %cst_21 = arith.constant 0.000000e+00 : f32
    %39 = vector.broadcast %cst_21 : f32 to vector<32x128xf32>
    %40 = arith.select %7, %38, %39 : vector<32x128xi1>, vector<32x128xf32>
    %41 = arith.mulf %28, %40 : vector<32x128xf32>
    %c0_i32_22 = arith.constant 0 : i32
    %42 = vector.broadcast %c0_i32_22 : i32 to vector<32x128xi32>
    %43 = arith.cmpi eq, %5, %42 : vector<32x128xi32>
    %44 = arith.extui %43 : vector<32x128xi1> to vector<32x128xi32>
    %45 = arith.sitofp %44 : vector<32x128xi32> to vector<32x128xf32>
    %c0_23 = arith.constant 0 : index
    %c0_24 = arith.constant 0 : index
    %c0_25 = arith.constant 0 : index
    %c0_26 = arith.constant 0 : index
    %c0_27 = arith.constant 0 : index
    %c0_28 = arith.constant 0 : index
    %46 = vector.load %arg5[%c0_23, %c0_24, %c0_25, %c0_26, %c0_27, %c0_28] : memref<1x1x3x4x8x128xf32, #tpu.memory_space<vmem>>, vector<1x1x1x1x8x128xf32>
    %47 = vector.shape_cast %46 : vector<1x1x1x1x8x128xf32> to vector<8x128xf32>
    %48 = arith.mulf %41, %45 : vector<32x128xf32>
    %49 = vector.shape_cast %48 : vector<32x128xf32> to vector<4x8x128xf32>
    %cst_29 = arith.constant dense<0.000000e+00> : vector<8x128xf32>
    %50 = vector.multi_reduction <add>, %49, %cst_29 [0] : vector<4x8x128xf32> to vector<8x128xf32>
    %51 = arith.addf %47, %50 : vector<8x128xf32>
    %c0_30 = arith.constant 0 : index
    %c0_31 = arith.constant 0 : index
    %c0_32 = arith.constant 0 : index
    %c0_33 = arith.constant 0 : index
    %c0_34 = arith.constant 0 : index
    %c0_35 = arith.constant 0 : index
    %52 = vector.load %arg5[%c0_30, %c0_31, %c0_32, %c0_33, %c0_34, %c0_35] : memref<1x1x3x4x8x128xf32, #tpu.memory_space<vmem>>, vector<1x1x1x1x8x128xf32>
    %53 = vector.shape_cast %52 : vector<1x1x1x1x8x128xf32> to vector<8x128xf32>
    %54 = vector.shape_cast %51 : vector<8x128xf32> to vector<1x1x1x1x8x128xf32>
    tpu.vector_store %arg5[%c0_30, %c0_31, %c0_32, %c0_33, %c0_34, %c0_35], %54 {strides = array<i32>} : memref<1x1x3x4x8x128xf32, #tpu.memory_space<vmem>>, vector<1x1x1x1x8x128xf32>,
    %c0_36 = arith.constant 0 : index
    %c0_37 = arith.constant 0 : index
    %c1_38 = arith.constant 1 : index
    %c0_39 = arith.constant 0 : index
    %c0_40 = arith.constant 0 : index
    %c0_41 = arith.constant 0 : index
    %55 = vector.load %arg5[%c0_36, %c0_37, %c1_38, %c0_39, %c0_40, %c0_41] : memref<1x1x3x4x8x128xf32, #tpu.memory_space<vmem>>, vector<1x1x1x1x8x128xf32>
    %56 = vector.shape_cast %55 : vector<1x1x1x1x8x128xf32> to vector<8x128xf32>
    %57 = vector.shape_cast %41 : vector<32x128xf32> to vector<4x8x128xf32>
    %cst_42 = arith.constant dense<0.000000e+00> : vector<8x128xf32>
    %58 = vector.multi_reduction <add>, %57, %cst_42 [0] : vector<4x8x128xf32> to vector<8x128xf32>
    %59 = arith.addf %56, %58 : vector<8x128xf32>
    %c0_43 = arith.constant 0 : index
    %c0_44 = arith.constant 0 : index
    %c1_45 = arith.constant 1 : index
    %c0_46 = arith.constant 0 : index
    %c0_47 = arith.constant 0 : index
    %c0_48 = arith.constant 0 : index
    %60 = vector.load %arg5[%c0_43, %c0_44, %c1_45, %c0_46, %c0_47, %c0_48] : memref<1x1x3x4x8x128xf32, #tpu.memory_space<vmem>>, vector<1x1x1x1x8x128xf32>
    %61 = vector.shape_cast %60 : vector<1x1x1x1x8x128xf32> to vector<8x128xf32>
    %62 = vector.shape_cast %59 : vector<8x128xf32> to vector<1x1x1x1x8x128xf32>
    tpu.vector_store %arg5[%c0_43, %c0_44, %c1_45, %c0_46, %c0_47, %c0_48], %62 {strides = array<i32>} : memref<1x1x3x4x8x128xf32, #tpu.memory_space<vmem>>, vector<1x1x1x1x8x128xf32>,
    %c0_49 = arith.constant 0 : index
    %c0_50 = arith.constant 0 : index
    %c2_51 = arith.constant 2 : index
    %c0_52 = arith.constant 0 : index
    %c0_53 = arith.constant 0 : index
    %c0_54 = arith.constant 0 : index
    %63 = vector.load %arg5[%c0_49, %c0_50, %c2_51, %c0_52, %c0_53, %c0_54] : memref<1x1x3x4x8x128xf32, #tpu.memory_space<vmem>>, vector<1x1x1x1x8x128xf32>
    %64 = vector.shape_cast %63 : vector<1x1x1x1x8x128xf32> to vector<8x128xf32>
    %65 = vector.shape_cast %45 : vector<32x128xf32> to vector<4x8x128xf32>
    %cst_55 = arith.constant dense<0.000000e+00> : vector<8x128xf32>
    %66 = vector.multi_reduction <add>, %65, %cst_55 [0] : vector<4x8x128xf32> to vector<8x128xf32>
    %67 = arith.addf %64, %66 : vector<8x128xf32>
    %c0_56 = arith.constant 0 : index
    %c0_57 = arith.constant 0 : index
    %c2_58 = arith.constant 2 : index
    %c0_59 = arith.constant 0 : index
    %c0_60 = arith.constant 0 : index
    %c0_61 = arith.constant 0 : index
    %68 = vector.load %arg5[%c0_56, %c0_57, %c2_58, %c0_59, %c0_60, %c0_61] : memref<1x1x3x4x8x128xf32, #tpu.memory_space<vmem>>, vector<1x1x1x1x8x128xf32>
    %69 = vector.shape_cast %68 : vector<1x1x1x1x8x128xf32> to vector<8x128xf32>
    %70 = vector.shape_cast %67 : vector<8x128xf32> to vector<1x1x1x1x8x128xf32>
    tpu.vector_store %arg5[%c0_56, %c0_57, %c2_58, %c0_59, %c0_60, %c0_61], %70 {strides = array<i32>} : memref<1x1x3x4x8x128xf32, #tpu.memory_space<vmem>>, vector<1x1x1x1x8x128xf32>,
    %71 = arith.mulf %30, %40 : vector<32x128xf32>
    %c1_i32 = arith.constant 1 : i32
    %72 = vector.broadcast %c1_i32 : i32 to vector<32x128xi32>
    %73 = arith.cmpi eq, %5, %72 : vector<32x128xi32>
    %74 = arith.extui %73 : vector<32x128xi1> to vector<32x128xi32>
    %75 = arith.sitofp %74 : vector<32x128xi32> to vector<32x128xf32>
    %c0_62 = arith.constant 0 : index
    %c0_63 = arith.constant 0 : index
    %c0_64 = arith.constant 0 : index
    %c1_65 = arith.constant 1 : index
    %c0_66 = arith.constant 0 : index
    %c0_67 = arith.constant 0 : index
    %76 = vector.load %arg5[%c0_62, %c0_63, %c0_64, %c1_65, %c0_66, %c0_67] : memref<1x1x3x4x8x128xf32, #tpu.memory_space<vmem>>, vector<1x1x1x1x8x128xf32>
    %77 = vector.shape_cast %76 : vector<1x1x1x1x8x128xf32> to vector<8x128xf32>
    %78 = arith.mulf %71, %75 : vector<32x128xf32>
    %79 = vector.shape_cast %78 : vector<32x128xf32> to vector<4x8x128xf32>
    %cst_68 = arith.constant dense<0.000000e+00> : vector<8x128xf32>
    %80 = vector.multi_reduction <add>, %79, %cst_68 [0] : vector<4x8x128xf32> to vector<8x128xf32>
    %81 = arith.addf %77, %80 : vector<8x128xf32>
    %c0_69 = arith.constant 0 : index
    %c0_70 = arith.constant 0 : index
    %c0_71 = arith.constant 0 : index
    %c1_72 = arith.constant 1 : index
    %c0_73 = arith.constant 0 : index
    %c0_74 = arith.constant 0 : index
    %82 = vector.load %arg5[%c0_69, %c0_70, %c0_71, %c1_72, %c0_73, %c0_74] : memref<1x1x3x4x8x128xf32, #tpu.memory_space<vmem>>, vector<1x1x1x1x8x128xf32>
    %83 = vector.shape_cast %82 : vector<1x1x1x1x8x128xf32> to vector<8x128xf32>
    %84 = vector.shape_cast %81 : vector<8x128xf32> to vector<1x1x1x1x8x128xf32>
    tpu.vector_store %arg5[%c0_69, %c0_70, %c0_71, %c1_72, %c0_73, %c0_74], %84 {strides = array<i32>} : memref<1x1x3x4x8x128xf32, #tpu.memory_space<vmem>>, vector<1x1x1x1x8x128xf32>,
    %c0_75 = arith.constant 0 : index
    %c0_76 = arith.constant 0 : index
    %c1_77 = arith.constant 1 : index
    %c1_78 = arith.constant 1 : index
    %c0_79 = arith.constant 0 : index
    %c0_80 = arith.constant 0 : index
    %85 = vector.load %arg5[%c0_75, %c0_76, %c1_77, %c1_78, %c0_79, %c0_80] : memref<1x1x3x4x8x128xf32, #tpu.memory_space<vmem>>, vector<1x1x1x1x8x128xf32>
    %86 = vector.shape_cast %85 : vector<1x1x1x1x8x128xf32> to vector<8x128xf32>
    %87 = vector.shape_cast %71 : vector<32x128xf32> to vector<4x8x128xf32>
    %cst_81 = arith.constant dense<0.000000e+00> : vector<8x128xf32>
    %88 = vector.multi_reduction <add>, %87, %cst_81 [0] : vector<4x8x128xf32> to vector<8x128xf32>
    %89 = arith.addf %86, %88 : vector<8x128xf32>
    %c0_82 = arith.constant 0 : index
    %c0_83 = arith.constant 0 : index
    %c1_84 = arith.constant 1 : index
    %c1_85 = arith.constant 1 : index
    %c0_86 = arith.constant 0 : index
    %c0_87 = arith.constant 0 : index
    %90 = vector.load %arg5[%c0_82, %c0_83, %c1_84, %c1_85, %c0_86, %c0_87] : memref<1x1x3x4x8x128xf32, #tpu.memory_space<vmem>>, vector<1x1x1x1x8x128xf32>
    %91 = vector.shape_cast %90 : vector<1x1x1x1x8x128xf32> to vector<8x128xf32>
    %92 = vector.shape_cast %89 : vector<8x128xf32> to vector<1x1x1x1x8x128xf32>
    tpu.vector_store %arg5[%c0_82, %c0_83, %c1_84, %c1_85, %c0_86, %c0_87], %92 {strides = array<i32>} : memref<1x1x3x4x8x128xf32, #tpu.memory_space<vmem>>, vector<1x1x1x1x8x128xf32>,
    %c0_88 = arith.constant 0 : index
    %c0_89 = arith.constant 0 : index
    %c2_90 = arith.constant 2 : index
    %c1_91 = arith.constant 1 : index
    %c0_92 = arith.constant 0 : index
    %c0_93 = arith.constant 0 : index
    %93 = vector.load %arg5[%c0_88, %c0_89, %c2_90, %c1_91, %c0_92, %c0_93] : memref<1x1x3x4x8x128xf32, #tpu.memory_space<vmem>>, vector<1x1x1x1x8x128xf32>
    %94 = vector.shape_cast %93 : vector<1x1x1x1x8x128xf32> to vector<8x128xf32>
    %95 = vector.shape_cast %75 : vector<32x128xf32> to vector<4x8x128xf32>
    %cst_94 = arith.constant dense<0.000000e+00> : vector<8x128xf32>
    %96 = vector.multi_reduction <add>, %95, %cst_94 [0] : vector<4x8x128xf32> to vector<8x128xf32>
    %97 = arith.addf %94, %96 : vector<8x128xf32>
    %c0_95 = arith.constant 0 : index
    %c0_96 = arith.constant 0 : index
    %c2_97 = arith.constant 2 : index
    %c1_98 = arith.constant 1 : index
    %c0_99 = arith.constant 0 : index
    %c0_100 = arith.constant 0 : index
    %98 = vector.load %arg5[%c0_95, %c0_96, %c2_97, %c1_98, %c0_99, %c0_100] : memref<1x1x3x4x8x128xf32, #tpu.memory_space<vmem>>, vector<1x1x1x1x8x128xf32>
    %99 = vector.shape_cast %98 : vector<1x1x1x1x8x128xf32> to vector<8x128xf32>
    %100 = vector.shape_cast %97 : vector<8x128xf32> to vector<1x1x1x1x8x128xf32>
    tpu.vector_store %arg5[%c0_95, %c0_96, %c2_97, %c1_98, %c0_99, %c0_100], %100 {strides = array<i32>} : memref<1x1x3x4x8x128xf32, #tpu.memory_space<vmem>>, vector<1x1x1x1x8x128xf32>,
    %101 = arith.mulf %33, %40 : vector<32x128xf32>
    %c2_i32 = arith.constant 2 : i32
    %102 = vector.broadcast %c2_i32 : i32 to vector<32x128xi32>
    %103 = arith.cmpi eq, %5, %102 : vector<32x128xi32>
    %104 = arith.extui %103 : vector<32x128xi1> to vector<32x128xi32>
    %105 = arith.sitofp %104 : vector<32x128xi32> to vector<32x128xf32>
    %c0_101 = arith.constant 0 : index
    %c0_102 = arith.constant 0 : index
    %c0_103 = arith.constant 0 : index
    %c2_104 = arith.constant 2 : index
    %c0_105 = arith.constant 0 : index
    %c0_106 = arith.constant 0 : index
    %106 = vector.load %arg5[%c0_101, %c0_102, %c0_103, %c2_104, %c0_105, %c0_106] : memref<1x1x3x4x8x128xf32, #tpu.memory_space<vmem>>, vector<1x1x1x1x8x128xf32>
    %107 = vector.shape_cast %106 : vector<1x1x1x1x8x128xf32> to vector<8x128xf32>
    %108 = arith.mulf %101, %105 : vector<32x128xf32>
    %109 = vector.shape_cast %108 : vector<32x128xf32> to vector<4x8x128xf32>
    %cst_107 = arith.constant dense<0.000000e+00> : vector<8x128xf32>
    %110 = vector.multi_reduction <add>, %109, %cst_107 [0] : vector<4x8x128xf32> to vector<8x128xf32>
    %111 = arith.addf %107, %110 : vector<8x128xf32>
    %c0_108 = arith.constant 0 : index
    %c0_109 = arith.constant 0 : index
    %c0_110 = arith.constant 0 : index
    %c2_111 = arith.constant 2 : index
    %c0_112 = arith.constant 0 : index
    %c0_113 = arith.constant 0 : index
    %112 = vector.load %arg5[%c0_108, %c0_109, %c0_110, %c2_111, %c0_112, %c0_113] : memref<1x1x3x4x8x128xf32, #tpu.memory_space<vmem>>, vector<1x1x1x1x8x128xf32>
    %113 = vector.shape_cast %112 : vector<1x1x1x1x8x128xf32> to vector<8x128xf32>
    %114 = vector.shape_cast %111 : vector<8x128xf32> to vector<1x1x1x1x8x128xf32>
    tpu.vector_store %arg5[%c0_108, %c0_109, %c0_110, %c2_111, %c0_112, %c0_113], %114 {strides = array<i32>} : memref<1x1x3x4x8x128xf32, #tpu.memory_space<vmem>>, vector<1x1x1x1x8x128xf32>,
    %c0_114 = arith.constant 0 : index
    %c0_115 = arith.constant 0 : index
    %c1_116 = arith.constant 1 : index
    %c2_117 = arith.constant 2 : index
    %c0_118 = arith.constant 0 : index
    %c0_119 = arith.constant 0 : index
    %115 = vector.load %arg5[%c0_114, %c0_115, %c1_116, %c2_117, %c0_118, %c0_119] : memref<1x1x3x4x8x128xf32, #tpu.memory_space<vmem>>, vector<1x1x1x1x8x128xf32>
    %116 = vector.shape_cast %115 : vector<1x1x1x1x8x128xf32> to vector<8x128xf32>
    %117 = vector.shape_cast %101 : vector<32x128xf32> to vector<4x8x128xf32>
    %cst_120 = arith.constant dense<0.000000e+00> : vector<8x128xf32>
    %118 = vector.multi_reduction <add>, %117, %cst_120 [0] : vector<4x8x128xf32> to vector<8x128xf32>
    %119 = arith.addf %116, %118 : vector<8x128xf32>
    %c0_121 = arith.constant 0 : index
    %c0_122 = arith.constant 0 : index
    %c1_123 = arith.constant 1 : index
    %c2_124 = arith.constant 2 : index
    %c0_125 = arith.constant 0 : index
    %c0_126 = arith.constant 0 : index
    %120 = vector.load %arg5[%c0_121, %c0_122, %c1_123, %c2_124, %c0_125, %c0_126] : memref<1x1x3x4x8x128xf32, #tpu.memory_space<vmem>>, vector<1x1x1x1x8x128xf32>
    %121 = vector.shape_cast %120 : vector<1x1x1x1x8x128xf32> to vector<8x128xf32>
    %122 = vector.shape_cast %119 : vector<8x128xf32> to vector<1x1x1x1x8x128xf32>
    tpu.vector_store %arg5[%c0_121, %c0_122, %c1_123, %c2_124, %c0_125, %c0_126], %122 {strides = array<i32>} : memref<1x1x3x4x8x128xf32, #tpu.memory_space<vmem>>, vector<1x1x1x1x8x128xf32>,
    %c0_127 = arith.constant 0 : index
    %c0_128 = arith.constant 0 : index
    %c2_129 = arith.constant 2 : index
    %c2_130 = arith.constant 2 : index
    %c0_131 = arith.constant 0 : index
    %c0_132 = arith.constant 0 : index
    %123 = vector.load %arg5[%c0_127, %c0_128, %c2_129, %c2_130, %c0_131, %c0_132] : memref<1x1x3x4x8x128xf32, #tpu.memory_space<vmem>>, vector<1x1x1x1x8x128xf32>
    %124 = vector.shape_cast %123 : vector<1x1x1x1x8x128xf32> to vector<8x128xf32>
    %125 = vector.shape_cast %105 : vector<32x128xf32> to vector<4x8x128xf32>
    %cst_133 = arith.constant dense<0.000000e+00> : vector<8x128xf32>
    %126 = vector.multi_reduction <add>, %125, %cst_133 [0] : vector<4x8x128xf32> to vector<8x128xf32>
    %127 = arith.addf %124, %126 : vector<8x128xf32>
    %c0_134 = arith.constant 0 : index
    %c0_135 = arith.constant 0 : index
    %c2_136 = arith.constant 2 : index
    %c2_137 = arith.constant 2 : index
    %c0_138 = arith.constant 0 : index
    %c0_139 = arith.constant 0 : index
    %128 = vector.load %arg5[%c0_134, %c0_135, %c2_136, %c2_137, %c0_138, %c0_139] : memref<1x1x3x4x8x128xf32, #tpu.memory_space<vmem>>, vector<1x1x1x1x8x128xf32>
    %129 = vector.shape_cast %128 : vector<1x1x1x1x8x128xf32> to vector<8x128xf32>
    %130 = vector.shape_cast %127 : vector<8x128xf32> to vector<1x1x1x1x8x128xf32>
    tpu.vector_store %arg5[%c0_134, %c0_135, %c2_136, %c2_137, %c0_138, %c0_139], %130 {strides = array<i32>} : memref<1x1x3x4x8x128xf32, #tpu.memory_space<vmem>>, vector<1x1x1x1x8x128xf32>,
    %131 = arith.mulf %36, %40 : vector<32x128xf32>
    %c3_i32 = arith.constant 3 : i32
    %132 = vector.broadcast %c3_i32 : i32 to vector<32x128xi32>
    %133 = arith.cmpi eq, %5, %132 : vector<32x128xi32>
    %134 = arith.extui %133 : vector<32x128xi1> to vector<32x128xi32>
    %135 = arith.sitofp %134 : vector<32x128xi32> to vector<32x128xf32>
    %c0_140 = arith.constant 0 : index
    %c0_141 = arith.constant 0 : index
    %c0_142 = arith.constant 0 : index
    %c3_143 = arith.constant 3 : index
    %c0_144 = arith.constant 0 : index
    %c0_145 = arith.constant 0 : index
    %136 = vector.load %arg5[%c0_140, %c0_141, %c0_142, %c3_143, %c0_144, %c0_145] : memref<1x1x3x4x8x128xf32, #tpu.memory_space<vmem>>, vector<1x1x1x1x8x128xf32>
    %137 = vector.shape_cast %136 : vector<1x1x1x1x8x128xf32> to vector<8x128xf32>
    %138 = arith.mulf %131, %135 : vector<32x128xf32>
    %139 = vector.shape_cast %138 : vector<32x128xf32> to vector<4x8x128xf32>
    %cst_146 = arith.constant dense<0.000000e+00> : vector<8x128xf32>
    %140 = vector.multi_reduction <add>, %139, %cst_146 [0] : vector<4x8x128xf32> to vector<8x128xf32>
    %141 = arith.addf %137, %140 : vector<8x128xf32>
    %c0_147 = arith.constant 0 : index
    %c0_148 = arith.constant 0 : index
    %c0_149 = arith.constant 0 : index
    %c3_150 = arith.constant 3 : index
    %c0_151 = arith.constant 0 : index
    %c0_152 = arith.constant 0 : index
    %142 = vector.load %arg5[%c0_147, %c0_148, %c0_149, %c3_150, %c0_151, %c0_152] : memref<1x1x3x4x8x128xf32, #tpu.memory_space<vmem>>, vector<1x1x1x1x8x128xf32>
    %143 = vector.shape_cast %142 : vector<1x1x1x1x8x128xf32> to vector<8x128xf32>
    %144 = vector.shape_cast %141 : vector<8x128xf32> to vector<1x1x1x1x8x128xf32>
    tpu.vector_store %arg5[%c0_147, %c0_148, %c0_149, %c3_150, %c0_151, %c0_152], %144 {strides = array<i32>} : memref<1x1x3x4x8x128xf32, #tpu.memory_space<vmem>>, vector<1x1x1x1x8x128xf32>,
    %c0_153 = arith.constant 0 : index
    %c0_154 = arith.constant 0 : index
    %c1_155 = arith.constant 1 : index
    %c3_156 = arith.constant 3 : index
    %c0_157 = arith.constant 0 : index
    %c0_158 = arith.constant 0 : index
    %145 = vector.load %arg5[%c0_153, %c0_154, %c1_155, %c3_156, %c0_157, %c0_158] : memref<1x1x3x4x8x128xf32, #tpu.memory_space<vmem>>, vector<1x1x1x1x8x128xf32>
    %146 = vector.shape_cast %145 : vector<1x1x1x1x8x128xf32> to vector<8x128xf32>
    %147 = vector.shape_cast %131 : vector<32x128xf32> to vector<4x8x128xf32>
    %cst_159 = arith.constant dense<0.000000e+00> : vector<8x128xf32>
    %148 = vector.multi_reduction <add>, %147, %cst_159 [0] : vector<4x8x128xf32> to vector<8x128xf32>
    %149 = arith.addf %146, %148 : vector<8x128xf32>
    %c0_160 = arith.constant 0 : index
    %c0_161 = arith.constant 0 : index
    %c1_162 = arith.constant 1 : index
    %c3_163 = arith.constant 3 : index
    %c0_164 = arith.constant 0 : index
    %c0_165 = arith.constant 0 : index
    %150 = vector.load %arg5[%c0_160, %c0_161, %c1_162, %c3_163, %c0_164, %c0_165] : memref<1x1x3x4x8x128xf32, #tpu.memory_space<vmem>>, vector<1x1x1x1x8x128xf32>
    %151 = vector.shape_cast %150 : vector<1x1x1x1x8x128xf32> to vector<8x128xf32>
    %152 = vector.shape_cast %149 : vector<8x128xf32> to vector<1x1x1x1x8x128xf32>
    tpu.vector_store %arg5[%c0_160, %c0_161, %c1_162, %c3_163, %c0_164, %c0_165], %152 {strides = array<i32>} : memref<1x1x3x4x8x128xf32, #tpu.memory_space<vmem>>, vector<1x1x1x1x8x128xf32>,
    %c0_166 = arith.constant 0 : index
    %c0_167 = arith.constant 0 : index
    %c2_168 = arith.constant 2 : index
    %c3_169 = arith.constant 3 : index
    %c0_170 = arith.constant 0 : index
    %c0_171 = arith.constant 0 : index
    %153 = vector.load %arg5[%c0_166, %c0_167, %c2_168, %c3_169, %c0_170, %c0_171] : memref<1x1x3x4x8x128xf32, #tpu.memory_space<vmem>>, vector<1x1x1x1x8x128xf32>
    %154 = vector.shape_cast %153 : vector<1x1x1x1x8x128xf32> to vector<8x128xf32>
    %155 = vector.shape_cast %135 : vector<32x128xf32> to vector<4x8x128xf32>
    %cst_172 = arith.constant dense<0.000000e+00> : vector<8x128xf32>
    %156 = vector.multi_reduction <add>, %155, %cst_172 [0] : vector<4x8x128xf32> to vector<8x128xf32>
    %157 = arith.addf %154, %156 : vector<8x128xf32>
    %c0_173 = arith.constant 0 : index
    %c0_174 = arith.constant 0 : index
    %c2_175 = arith.constant 2 : index
    %c3_176 = arith.constant 3 : index
    %c0_177 = arith.constant 0 : index
    %c0_178 = arith.constant 0 : index
    %158 = vector.load %arg5[%c0_173, %c0_174, %c2_175, %c3_176, %c0_177, %c0_178] : memref<1x1x3x4x8x128xf32, #tpu.memory_space<vmem>>, vector<1x1x1x1x8x128xf32>
    %159 = vector.shape_cast %158 : vector<1x1x1x1x8x128xf32> to vector<8x128xf32>
    %160 = vector.shape_cast %157 : vector<8x128xf32> to vector<1x1x1x1x8x128xf32>
    tpu.vector_store %arg5[%c0_173, %c0_174, %c2_175, %c3_176, %c0_177, %c0_178], %160 {strides = array<i32>} : memref<1x1x3x4x8x128xf32, #tpu.memory_space<vmem>>, vector<1x1x1x1x8x128xf32>,
    return
  }
  func.func @transform_0(%arg0: i32, %arg1: i32, %arg2: i32) -> (i32, i32, i32, i32) {
    %c1_i32 = arith.constant 1 : i32
    %0 = arith.muli %arg1, %c1_i32 : i32
    %1 = arith.addi %0, %arg2 : i32
    %c0_i32 = arith.constant 0 : i32
    %c0_i32_0 = arith.constant 0 : i32
    %c0_i32_1 = arith.constant 0 : i32
    return %arg0, %c0_i32, %1, %c0_i32_0 : i32, i32, i32, i32
  }
  func.func @transform_1(%arg0: i32, %arg1: i32, %arg2: i32) -> (i32, i32, i32, i32) {
    %c1_i32 = arith.constant 1 : i32
    %0 = arith.muli %arg1, %c1_i32 : i32
    %1 = arith.addi %0, %arg2 : i32
    %c0_i32 = arith.constant 0 : i32
    %c0_i32_0 = arith.constant 0 : i32
    %c0_i32_1 = arith.constant 0 : i32
    return %arg0, %c0_i32, %1, %c0_i32_0 : i32, i32, i32, i32
  }
  func.func @transform_2(%arg0: i32, %arg1: i32, %arg2: i32) -> (i32, i32, i32, i32, i32, i32) {
    %c0_i32 = arith.constant 0 : i32
    %c0_i32_0 = arith.constant 0 : i32
    %c0_i32_1 = arith.constant 0 : i32
    %c0_i32_2 = arith.constant 0 : i32
    %c0_i32_3 = arith.constant 0 : i32
    return %arg0, %arg1, %c0_i32, %c0_i32_0, %c0_i32_1, %c0_i32_2 : i32, i32, i32, i32, i32, i32
  }
}

</mosaic_0001>

<llo_original>
// kernel: tpu_custom_call.1
$region0: #{tpu_custom_call.1}
  #allocation0 [shape = 'u32[]', space=smem, size = 0x4, offset = 0x4, fixed_abs, tag = 'smem constant byte address 0x4 - core index']
  #allocation1 [shape = 'u32[144,128]{1,0:T(1,128)}', space=vmem, size = 0x12000, scoped, tag = 'internal scratch']
  #allocation8 [shape = 's32[]', space=sflag, size = 0x4, offset = 0, fixed_abs, tag = 'sflag constant byte address 0x0 - dummy sync flag']
  %s0 = inlined_call_operand.hbm [shape: f32[2,4,2,128], index: 0, kind: input, shape index: {}]
  %s1 = inlined_call_operand.hbm [shape: s8[2,1,32,128], index: 1, kind: input, shape index: {}]
  %s2 = inlined_call_operand.hbm [shape: f32[2,1,3,4,8,128], index: 2, kind: output, shape index: {}]
  %s3 = sld [smem:[#allocation0]]
  $region53: #{tpu_custom_call.1} parent=0
    _
  %s5 = ssub.s32 1, %s3
  %s6 = scalar_select 0, %s5, %s3
  $region1: #{tpu_custom_call.1} parent=0
    #allocation2 [shape = 'u8[131072]{0}', space=vmem, size = 0x20000, scoped, tag = 'input window, operand 0']
    #allocation3 [shape = 's32[2]{0}', space=sflag, size = 0x8, scoped, tag = 'scoped memory for tpu_custom_call.1']
    #allocation4 [shape = 's32[2]{0}', space=sflag, size = 0x8, scoped, tag = 'scoped memory for tpu_custom_call.1']
    #allocation5 [shape = 'u8[8192]{0}', space=vmem, size = 0x2000, scoped, tag = 'input window, operand 1']
    #allocation6 [shape = 's32[2]{0}', space=sflag, size = 0x8, scoped, tag = 'scoped memory for tpu_custom_call.1']
    #allocation7 [shape = 'u8[98304]{0}', space=vmem, size = 0x18000, scoped, tag = 'output window, operand 0']
    %7 = vsyncpa [#allocation3], 0
    %s8 = scalar_lea.sflag [#allocation3], 1
    %9 = vsyncpa %s8, 0
    %10 = vsyncpa [#allocation6], 0
    %s11 = scalar_lea.sflag [#allocation6], 1
    %12 = vsyncpa %s11, 0
    %13 = vsyncpa [#allocation4], 0
    %s14 = scalar_lea.sflag [#allocation4], 1
    %15 = vsyncpa %s14, 0
    loop: start=0, step=1, limit=4
    $region2: #{tpu_custom_call.1} parent=1 // loop_pre_header
      _
    $region3: #{tpu_custom_call.1} parent=1 // loop_header
      %s17 = sphi 0, %s21
      %p18 = scmp.ge.s32.totalorder %s17, 4
      %s24 = sphi 0, %s43
      %s25 = sphi 0, %s39
      %s26 = sphi 0, %s35
      %s27 = sphi 0, %s24
      %s28 = sphi 0, %s25
      %s29 = sphi 0, %s26
      %s30 = sphi 0, %s27
      %s31 = sphi 0, %s28
      %s32 = sphi 0, %s29
      %s50 = sphi 0, %s52
      %s53 = sphi 0, %s50
      %s54 = sphi 0, %s53
      %s70 = sphi 0, %s54
      %s80 = sphi 0, %s82
      %s83 = sphi 0, %s80
      %s84 = sphi 0, %s83
      %s100 = sphi 0, %s84
      %s108 = sphi 0, %s110
      %s111 = sphi 0, %s108
      %s112 = sphi 0, %s111
      %s128 = sphi 0, %s112
    $region4: #{tpu_custom_call.1} parent=1 // loop_header_branch
      %20 = sbr.rel (%p18) target = $region8
    $region5: #{tpu_custom_call.1} parent=1 // loop_body
      %s22 = ssub.s32 %s17, 1
      %s23 = ssub.s32 %s17, 2
      %s33 = sadd.s32 1, %s26
      %p34 = scmp.ge.s32.totalorder %s33, 1
      %s35 = scalar_select %p34, 0, %s33
      %s36 = sadd.s32 1, %s25
      %s37 = scalar_select %p34, %s36, %s25
      %p38 = scmp.ge.s32.totalorder %s37, 1
      %s39 = scalar_select %p38, 0, %s37
      %s40 = sadd.s32 1, %s24
      %s41 = scalar_select %p38, %s40, %s24
      %p42 = scmp.ge.s32.totalorder %s41, 2
      %s43 = scalar_select %p42, 0, %s41
      %s44 = sadd.s32 %s25, %s26
      %s45 = sadd.s32 %s39, %s35
      %s46 = ssub.s32 %s24, %s43
      %s47 = ssub.s32 %s44, %s45
      %s48 = sor.u32 %s46, %s47
      %p49 = scmp.eq.s32.totalorder %s48, 0
      %s51 = sadd.s32 %s50, 1
      %s52 = scalar_select %p49, %s50, %s51
      %p55 = pneg %p49
      %p56 = scmp.eq.s32.totalorder %s17, 1
      %p57 = por %p55, %p56
      %p58 = scmp.ne.s32.totalorder %s50, %s53
      %p59 = scmp.eq.s32.totalorder %s17, 0
      %p60 = por %p58, %p59
      %p61 = scmp.ne.s32.totalorder %s50, %s53
      %p62 = scmp.eq.s32.totalorder %s22, 1
      %p63 = por %p61, %p62
      %p64 = scmp.ne.s32.totalorder %s53, %s54
      %p65 = scmp.eq.s32.totalorder %s22, 0
      %p66 = por %p64, %p65
      %p67 = scmp.ne.s32.totalorder %s53, %s54
      %p68 = scmp.eq.s32.totalorder %s23, 1
      %p69 = por %p67, %p68
      %p71 = scmp.ne.s32.totalorder %s54, %s70
      %p72 = scmp.eq.s32.totalorder %s23, 0
      %p73 = por %p71, %p72
      %s74 = sadd.s32 %s25, %s26
      %s75 = sadd.s32 %s39, %s35
      %s76 = ssub.s32 %s24, %s43
      %s77 = ssub.s32 %s74, %s75
      %s78 = sor.u32 %s76, %s77
      %p79 = scmp.eq.s32.totalorder %s78, 0
      %s81 = sadd.s32 %s80, 1
      %s82 = scalar_select %p79, %s80, %s81
      %p85 = pneg %p79
      %p86 = scmp.eq.s32.totalorder %s17, 1
      %p87 = por %p85, %p86
      %p88 = scmp.ne.s32.totalorder %s80, %s83
      %p89 = scmp.eq.s32.totalorder %s17, 0
      %p90 = por %p88, %p89
      %p91 = scmp.ne.s32.totalorder %s80, %s83
      %p92 = scmp.eq.s32.totalorder %s22, 1
      %p93 = por %p91, %p92
      %p94 = scmp.ne.s32.totalorder %s83, %s84
      %p95 = scmp.eq.s32.totalorder %s22, 0
      %p96 = por %p94, %p95
      %p97 = scmp.ne.s32.totalorder %s83, %s84
      %p98 = scmp.eq.s32.totalorder %s23, 1
      %p99 = por %p97, %p98
      %p101 = scmp.ne.s32.totalorder %s84, %s100
      %p102 = scmp.eq.s32.totalorder %s23, 0
      %p103 = por %p101, %p102
      %s104 = ssub.s32 %s24, %s43
      %s105 = ssub.s32 %s25, %s39
      %s106 = sor.u32 %s104, %s105
      %p107 = scmp.eq.s32.totalorder %s106, 0
      %s109 = sadd.s32 %s108, 1
      %s110 = scalar_select %p107, %s108, %s109
      %p113 = pneg %p107
      %p114 = scmp.eq.s32.totalorder %s17, 1
      %p115 = por %p113, %p114
      %p116 = scmp.ne.s32.totalorder %s108, %s111
      %p117 = scmp.eq.s32.totalorder %s17, 0
      %p118 = por %p116, %p117
      %p119 = scmp.ne.s32.totalorder %s108, %s111
      %p120 = scmp.eq.s32.totalorder %s22, 1
      %p121 = por %p119, %p120
      %p122 = scmp.ne.s32.totalorder %s111, %s112
      %p123 = scmp.eq.s32.totalorder %s22, 0
      %p124 = por %p122, %p123
      %p125 = scmp.ne.s32.totalorder %s111, %s112
      %p126 = scmp.eq.s32.totalorder %s23, 1
      %p127 = por %p125, %p126
      %p129 = scmp.ne.s32.totalorder %s112, %s128
      %p130 = scmp.eq.s32.totalorder %s23, 0
      %p131 = por %p129, %p130
      %p132 = scmp.le.s32.totalorder 1, %s17
      %p133 = scmp.lt.s32.totalorder %s17, 3
      %p134 = pnand %p132, %p133
      %p135 = pneg %p134
      // Predicated region
      $region9: #{tpu_custom_call.1} parent=5 // pred_check
        _
      $region10: #{tpu_custom_call.1} parent=5 // pred_check_branch
        %137 = sbr.rel (%p134) target = $region12
      $region11: #{tpu_custom_call.1} parent=5 // pred_region
        %s138 = ssub.s32 %s17, 1
      $region12: #{tpu_custom_call.1} parent=5 // pred_fallthru
        _
      %p139 = scmp.lt.s32.totalorder %s17, 2
      // Predicated region
      $region13: #{tpu_custom_call.1} parent=5 // pred_check
        %p140 = pneg %p139
      $region14: #{tpu_custom_call.1} parent=5 // pred_check_branch
        %142 = sbr.rel (%p140) target = $region16
      $region15: #{tpu_custom_call.1} parent=5 // pred_region
        // Predicated region
        $region17: #{tpu_custom_call.1} parent=15 // pred_check
          %p143 = pneg %p60
        $region18: #{tpu_custom_call.1} parent=15 // pred_check_branch
          %145 = sbr.rel (%p143) target = $region20
        $region19: #{tpu_custom_call.1} parent=15 // pred_region
          #allocation9 [shape = 'u32[6]{0}', space=smem, size = 0x18, scoped, tag = 'DMA stride descriptor']
          %s146 = sand.u32 %s50, 1
          %s147 = scalar_lea.sflag [#allocation3], %s146
          %s148 = sand.u32 %s50, 1
          %s149 = smul.addr %s148, 128
          %s150 = scalar_lea.vmem [#allocation2], %s149
          %s151 = sadd.s32 %s25, %s26
          %s152 = smul.u32 16, %s151
          %s153 = ssub.s32 1, %s152
          %s154 = smul.u32 128, %s153
          %s156 = ssub.s32 2048, %s154
          %157 = vsyncadd %s147, %s156
          %p158 = scmp.ne.s32.totalorder 0, %s154
          %s159 = smul.addr %s24, 4
          %s160 = sadd.s32 %s152, %s159
          %s161 = smul.addr %s160, 32
          %s162 = scalar_lea.hbm %s0, %s161
          %s163 = smul.u32 2, %s153
          %s164 = smul.u32 %s163, 4
          %s166 = sshll.u32 1, 14
          %s167 = sxor.u32 4294967295, %s166
          %s169 = sld [smem:[#allocation0]]
          %s170 = sadd.s32 2, %s169
          %s172 = sshll.u32 7, 26
          %s173 = sxor.u32 4294967295, %s172
          %s174 = sand.u32 0, %s173
          %s175 = sshll.u32 %s170, 26
          %s176 = sor.u32 %s174, %s175
          %s177 = sshll.u32 %s150, 4
          %s178 = int_to_ptr.vmem [resolvable:$true] %s177
          %s179 = sshll.u32 %s164, 4
          %184 = sst [smem:[#allocation9]] 32
          %s185 = scalar_lea.smem [#allocation9], 1
          %186 = sst [smem:[%s185]] 512
          %s187 = scalar_lea.smem [#allocation9], 2
          %188 = sst [smem:[%s187]] %s153
          %s189 = scalar_lea.smem [#allocation9], 3
          %190 = sst [smem:[%s189]] 32
          %s191 = scalar_lea.smem [#allocation9], 4
          %192 = sst [smem:[%s191]] 32
          %s193 = scalar_lea.smem [#allocation9], 5
          %194 = sst [smem:[%s193]] 2
          %196 = dma.general (%p158), %s162, %s179, %s178, %s147, [#allocation8], [#allocation9], %s176, 0
        $region20: #{tpu_custom_call.1} parent=15 // pred_fallthru
          _
        // Predicated region
        $region21: #{tpu_custom_call.1} parent=15 // pred_check
          %p197 = pneg %p90
        $region22: #{tpu_custom_call.1} parent=15 // pred_check_branch
          %199 = sbr.rel (%p197) target = $region24
        $region23: #{tpu_custom_call.1} parent=15 // pred_region
          %s200 = sand.u32 %s80, 1
          %s201 = scalar_lea.sflag [#allocation6], %s200
          %s202 = sand.u32 %s80, 1
          %s203 = smul.addr %s202, 8
          %s204 = scalar_lea.vmem [#allocation5], %s203
          %s205 = sadd.s32 %s25, %s26
          %s207 = ssub.s32 128, 128
          %208 = vsyncadd %s201, %s207
          %s209 = sadd.s32 %s205, %s24
          %s210 = smul.addr %s209, 128
          %s211 = scalar_lea.hbm %s1, %s210
          %s213 = sshll.u32 %s204, 4
          %s214 = int_to_ptr.vmem [resolvable:$true] %s213
          %216 = dma.hbm_to_vmem [thread:$0]  %s211, 128, %s214, %s201
        $region24: #{tpu_custom_call.1} parent=15 // pred_fallthru
          _
      $region16: #{tpu_custom_call.1} parent=5 // pred_fallthru
        _
      %p217 = scmp.le.s32.totalorder 1, %s17
      %p218 = scmp.lt.s32.totalorder %s17, 3
      %p219 = pnand %p217, %p218
      %p220 = pneg %p219
      // Predicated region
      $region25: #{tpu_custom_call.1} parent=5 // pred_check
        _
      $region26: #{tpu_custom_call.1} parent=5 // pred_check_branch
        %222 = sbr.rel (%p219) target = $region28
      $region27: #{tpu_custom_call.1} parent=5 // pred_region
        %s223 = ssub.s32 %s17, 1
        %s224 = sand.u32 %s53, 1
        %s225 = scalar_lea.sflag [#allocation3], %s224
        %s226 = sand.u32 %s53, 1
        %s227 = smul.addr %s226, 128
        %s228 = scalar_lea.vmem [#allocation2], %s227
        // Predicated region
        $region29: #{tpu_custom_call.1} parent=27 // pred_check
          %p229 = pneg %p66
        $region30: #{tpu_custom_call.1} parent=27 // pred_check_branch
          %231 = sbr.rel (%p229) target = $region32
        $region31: #{tpu_custom_call.1} parent=27 // pred_region
          %232 = dma.done %s225, 2048
        $region32: #{tpu_custom_call.1} parent=27 // pred_fallthru
          _
        %s233 = sand.u32 %s83, 1
        %s234 = scalar_lea.sflag [#allocation6], %s233
        %s235 = sand.u32 %s83, 1
        %s236 = smul.addr %s235, 8
        %s237 = scalar_lea.vmem [#allocation5], %s236
        // Predicated region
        $region33: #{tpu_custom_call.1} parent=27 // pred_check
          %p238 = pneg %p96
        $region34: #{tpu_custom_call.1} parent=27 // pred_check_branch
          %240 = sbr.rel (%p238) target = $region36
        $region35: #{tpu_custom_call.1} parent=27 // pred_region
          %241 = dma.done %s234, 128
        $region36: #{tpu_custom_call.1} parent=27 // pred_fallthru
          _
        %s242 = sand.u32 %s53, 1
        %s243 = scalar_lea.sflag [#allocation3], %s242
        %s244 = sand.u32 %s53, 1
        %s245 = smul.addr %s244, 128
        %s246 = scalar_lea.vmem [#allocation2], %s245
        %p247 = pneg %p66
        %p248 = pneg %p63
        %s249 = sand.u32 %s83, 1
        %s250 = scalar_lea.sflag [#allocation6], %s249
        %s251 = sand.u32 %s83, 1
        %s252 = smul.addr %s251, 8
        %s253 = scalar_lea.vmem [#allocation5], %s252
        %p254 = pneg %p96
        %p255 = pneg %p93
        %p256 = pneg %p124
        %p257 = pneg %p121
        %s258 = sand.u32 %s111, 1
        %s259 = scalar_lea.sflag [#allocation4], %s258
        %s260 = sand.u32 %s111, 1
        %s261 = smul.addr %s260, 96
        %s262 = scalar_lea.vmem [#allocation7], %s261
        %s263 = sadd.s32 %s28, %s29
        %s264 = smul.u32 16, %s263
        %s265 = ssub.s32 1, %s264
        %s266 = smul.u32 128, %s265
        %s267 = sadd.s32 %s28, %s29
        %p268 = scmp.eq.s32.totalorder %s29, 0
        // Predicated region
        $region37: #{tpu_custom_call.1} parent=27 // pred_check
          %p269 = pneg %p268
        $region38: #{tpu_custom_call.1} parent=27 // pred_check_branch
          %271 = sbr.rel (%p269) target = $region40
        $region39: #{tpu_custom_call.1} parent=27 // pred_region
          %272 = vst [vmem:[%s262] sm:$0xff] 0.0
          %273 = vst [vmem:[%s262 + $0x8] sm:$0xff] 0.0
          %274 = vst [vmem:[%s262 + $0x10] sm:$0xff] 0.0
          %275 = vst [vmem:[%s262 + $0x18] sm:$0xff] 0.0
          %276 = vst [vmem:[%s262 + $0x20] sm:$0xff] 0.0
          %277 = vst [vmem:[%s262 + $0x28] sm:$0xff] 0.0
          %278 = vst [vmem:[%s262 + $0x30] sm:$0xff] 0.0
          %279 = vst [vmem:[%s262 + $0x38] sm:$0xff] 0.0
          %280 = vst [vmem:[%s262 + $0x40] sm:$0xff] 0.0
          %281 = vst [vmem:[%s262 + $0x48] sm:$0xff] 0.0
          %282 = vst [vmem:[%s262 + $0x50] sm:$0xff] 0.0
          %283 = vst [vmem:[%s262 + $0x58] sm:$0xff] 0.0
        $region40: #{tpu_custom_call.1} parent=27 // pred_fallthru
          _
        %v284 = vld [vmem:[%s237] sm:$0xff]
        %v285 = vunpack.c.0.s8 %v284
        %v286 = vunpack.c.1.s8 %v284
        %v287 = vunpack.c.2.s8 %v284
        %v288 = vunpack.c.3.s8 %v284
        %vm289 = vcmp.ge.s32.totalorder %v285, 0
        %vm290 = vcmp.ge.s32.totalorder %v286, 0
        %vm291 = vcmp.ge.s32.totalorder %v287, 0
        %vm292 = vcmp.ge.s32.totalorder %v288, 0
        %v293 = vld [vmem:[%s228] sm:$0xff]
        %v294 = vld [vmem:[%s228 + $0x8] sm:$0xff]
        %v295 = vld [vmem:[%s228 + $0x10] sm:$0xff]
        %v296 = vld [vmem:[%s228 + $0x18] sm:$0xff]
        %v297 = vsel %vm289, %v293, 0.0
        %v298 = vsel %vm290, %v294, 0.0
        %v299 = vsel %vm291, %v295, 0.0
        %v300 = vsel %vm292, %v296, 0.0
        %s301 = scalar_lea.vmem %s228, 32 [#allocation2]
        %v302 = vld [vmem:[%s301] sm:$0xff]
        %v303 = vld [vmem:[%s301 + $0x8] sm:$0xff]
        %v304 = vld [vmem:[%s301 + $0x10] sm:$0xff]
        %v305 = vld [vmem:[%s301 + $0x18] sm:$0xff]
        %v306 = vsel %vm289, %v302, 0.0
        %v307 = vsel %vm290, %v303, 0.0
        %v308 = vsel %vm291, %v304, 0.0
        %v309 = vsel %vm292, %v305, 0.0
        %s310 = scalar_lea.vmem %s228, 64 [#allocation2]
        %v311 = vld [vmem:[%s310] sm:$0xff]
        %v312 = vld [vmem:[%s310 + $0x8] sm:$0xff]
        %v313 = vld [vmem:[%s310 + $0x10] sm:$0xff]
        %v314 = vld [vmem:[%s310 + $0x18] sm:$0xff]
        %v315 = vsel %vm289, %v311, 0.0
        %v316 = vsel %vm290, %v312, 0.0
        %v317 = vsel %vm291, %v313, 0.0
        %v318 = vsel %vm292, %v314, 0.0
        %s319 = scalar_lea.vmem %s228, 96 [#allocation2]
        %v320 = vld [vmem:[%s319] sm:$0xff]
        %v321 = vld [vmem:[%s319 + $0x8] sm:$0xff]
        %v322 = vld [vmem:[%s319 + $0x10] sm:$0xff]
        %v323 = vld [vmem:[%s319 + $0x18] sm:$0xff]
        %v324 = vsel %vm289, %v320, 0.0
        %v325 = vsel %vm290, %v321, 0.0
        %v326 = vsel %vm291, %v322, 0.0
        %v327 = vsel %vm292, %v323, 0.0
        %v328 = vmax.f32 %v297, %v306
        %v329 = vmax.f32 %v298, %v307
        %v330 = vmax.f32 %v299, %v308
        %v331 = vmax.f32 %v300, %v309
        %v332 = vmax.f32 %v328, %v315
        %v333 = vmax.f32 %v329, %v316
        %v334 = vmax.f32 %v330, %v317
        %v335 = vmax.f32 %v331, %v318
        %v336 = vmax.f32 %v332, %v324
        %v337 = vmax.f32 %v333, %v325
        %v338 = vmax.f32 %v334, %v326
        %v339 = vmax.f32 %v335, %v327
        %v340 = vsub.f32 %v297, %v336
        %v341 = vsub.f32 %v298, %v337
        %v342 = vsub.f32 %v299, %v338
        %v343 = vsub.f32 %v300, %v339
        %v344 = vmul.f32 %v340, 1.442695
        %v345 = vpow.pop %v344
        %v346 = vmul.f32 %v341, 1.442695
        %v347 = vpow.pop %v346
        %v348 = vmul.f32 %v342, 1.442695
        %v349 = vpow.pop %v348
        %v350 = vmul.f32 %v343, 1.442695
        %v351 = vpow.pop %v350
        %v352 = vsub.f32 %v306, %v336
        %v353 = vsub.f32 %v307, %v337
        %v354 = vsub.f32 %v308, %v338
        %v355 = vsub.f32 %v309, %v339
        %v356 = vmul.f32 %v352, 1.442695
        %v357 = vpow.pop %v356
        %v358 = vmul.f32 %v353, 1.442695
        %v359 = vpow.pop %v358
        %v360 = vmul.f32 %v354, 1.442695
        %v361 = vpow.pop %v360
        %v362 = vmul.f32 %v355, 1.442695
        %v363 = vpow.pop %v362
        %v364 = vadd.f32 %v345, %v357
        %v365 = vadd.f32 %v347, %v359
        %v366 = vadd.f32 %v349, %v361
        %v367 = vadd.f32 %v351, %v363
        %v368 = vsub.f32 %v315, %v336
        %v369 = vsub.f32 %v316, %v337
        %v370 = vsub.f32 %v317, %v338
        %v371 = vsub.f32 %v318, %v339
        %v372 = vmul.f32 %v368, 1.442695
        %v373 = vpow.pop %v372
        %v374 = vmul.f32 %v369, 1.442695
        %v375 = vpow.pop %v374
        %v376 = vmul.f32 %v370, 1.442695
        %v377 = vpow.pop %v376
        %v378 = vmul.f32 %v371, 1.442695
        %v379 = vpow.pop %v378
        %v380 = vadd.f32 %v364, %v373
        %v381 = vadd.f32 %v365, %v375
        %v382 = vadd.f32 %v366, %v377
        %v383 = vadd.f32 %v367, %v379
        %v384 = vsub.f32 %v324, %v336
        %v385 = vsub.f32 %v325, %v337
        %v386 = vsub.f32 %v326, %v338
        %v387 = vsub.f32 %v327, %v339
        %v388 = vmul.f32 %v384, 1.442695
        %v389 = vpow.pop %v388
        %v390 = vmul.f32 %v385, 1.442695
        %v391 = vpow.pop %v390
        %v392 = vmul.f32 %v386, 1.442695
        %v393 = vpow.pop %v392
        %v394 = vmul.f32 %v387, 1.442695
        %v395 = vpow.pop %v394
        %v396 = vadd.f32 %v380, %v389
        %v397 = vadd.f32 %v381, %v391
        %v398 = vadd.f32 %v382, %v393
        %v399 = vadd.f32 %v383, %v395
        %v400 = vrcp.pop %v396
        %v401 = vrcp.pop %v397
        %v402 = vrcp.pop %v398
        %v403 = vrcp.pop %v399
        %v404 = vsel %vm289, %v400, 0.0
        %v405 = vsel %vm290, %v401, 0.0
        %v406 = vsel %vm291, %v402, 0.0
        %v407 = vsel %vm292, %v403, 0.0
        %v408 = vmul.f32 %v345, %v404
        %v409 = vmul.f32 %v347, %v405
        %v410 = vmul.f32 %v349, %v406
        %v411 = vmul.f32 %v351, %v407
        %vm412 = vcmp.eq.s32.totalorder %v285, 0
        %vm413 = vcmp.eq.s32.totalorder %v286, 0
        %vm414 = vcmp.eq.s32.totalorder %v287, 0
        %vm415 = vcmp.eq.s32.totalorder %v288, 0
        %v416 = vsel %vm412, 1, 0
        %v417 = vsel %vm413, 1, 0
        %v418 = vsel %vm414, 1, 0
        %v419 = vsel %vm415, 1, 0
        %v420 = vcvt.s32.f32 %v416
        %v421 = vcvt.s32.f32 %v417
        %v422 = vcvt.s32.f32 %v418
        %v423 = vcvt.s32.f32 %v419
        %v424 = vld [vmem:[%s262] sm:$0xff]
        %v425 = vmul.f32 %v408, %v420
        %v426 = vmul.f32 %v409, %v421
        %v427 = vmul.f32 %v410, %v422
        %v428 = vmul.f32 %v411, %v423
        %v429 = vadd.f32 %v425, %v426
        %v430 = vadd.f32 %v429, %v427
        %v431 = vadd.f32 %v430, %v428
        %v432 = vadd.f32 %v424, %v431
        %433 = vst [vmem:[%s262] sm:$0xff] %v432
        %s434 = scalar_lea.vmem %s262, 32 [#allocation7]
        %v435 = vld [vmem:[%s434] sm:$0xff]
        %v436 = vadd.f32 %v408, %v409
        %v437 = vadd.f32 %v436, %v410
        %v438 = vadd.f32 %v437, %v411
        %v439 = vadd.f32 %v435, %v438
        %440 = vst [vmem:[%s434] sm:$0xff] %v439
        %s441 = scalar_lea.vmem %s262, 64 [#allocation7]
        %v442 = vld [vmem:[%s441] sm:$0xff]
        %v443 = vadd.f32 %v420, %v421
        %v444 = vadd.f32 %v443, %v422
        %v445 = vadd.f32 %v444, %v423
        %v446 = vadd.f32 %v442, %v445
        %447 = vst [vmem:[%s441] sm:$0xff] %v446
        %v448 = vmul.f32 %v357, %v404
        %v449 = vmul.f32 %v359, %v405
        %v450 = vmul.f32 %v361, %v406
        %v451 = vmul.f32 %v363, %v407
        %vm452 = vcmp.eq.s32.totalorder %v285, 1
        %vm453 = vcmp.eq.s32.totalorder %v286, 1
        %vm454 = vcmp.eq.s32.totalorder %v287, 1
        %vm455 = vcmp.eq.s32.totalorder %v288, 1
        %v456 = vsel %vm452, 1, 0
        %v457 = vsel %vm453, 1, 0
        %v458 = vsel %vm454, 1, 0
        %v459 = vsel %vm455, 1, 0
        %v460 = vcvt.s32.f32 %v456
        %v461 = vcvt.s32.f32 %v457
        %v462 = vcvt.s32.f32 %v458
        %v463 = vcvt.s32.f32 %v459
        %s464 = scalar_lea.vmem %s262, 8 [#allocation7]
        %v465 = vld [vmem:[%s464] sm:$0xff]
        %v466 = vmul.f32 %v448, %v460
        %v467 = vmul.f32 %v449, %v461
        %v468 = vmul.f32 %v450, %v462
        %v469 = vmul.f32 %v451, %v463
        %v470 = vadd.f32 %v466, %v467
        %v471 = vadd.f32 %v470, %v468
        %v472 = vadd.f32 %v471, %v469
        %v473 = vadd.f32 %v465, %v472
        %474 = vst [vmem:[%s464] sm:$0xff] %v473
        %s475 = scalar_lea.vmem %s262, 40 [#allocation7]
        %v476 = vld [vmem:[%s475] sm:$0xff]
        %v477 = vadd.f32 %v448, %v449
        %v478 = vadd.f32 %v477, %v450
        %v479 = vadd.f32 %v478, %v451
        %v480 = vadd.f32 %v476, %v479
        %481 = vst [vmem:[%s475] sm:$0xff] %v480
        %s482 = scalar_lea.vmem %s262, 72 [#allocation7]
        %v483 = vld [vmem:[%s482] sm:$0xff]
        %v484 = vadd.f32 %v460, %v461
        %v485 = vadd.f32 %v484, %v462
        %v486 = vadd.f32 %v485, %v463
        %v487 = vadd.f32 %v483, %v486
        %488 = vst [vmem:[%s482] sm:$0xff] %v487
        %v489 = vmul.f32 %v373, %v404
        %v490 = vmul.f32 %v375, %v405
        %v491 = vmul.f32 %v377, %v406
        %v492 = vmul.f32 %v379, %v407
        %vm493 = vcmp.eq.s32.totalorder %v285, 2
        %vm494 = vcmp.eq.s32.totalorder %v286, 2
        %vm495 = vcmp.eq.s32.totalorder %v287, 2
        %vm496 = vcmp.eq.s32.totalorder %v288, 2
        %v497 = vsel %vm493, 1, 0
        %v498 = vsel %vm494, 1, 0
        %v499 = vsel %vm495, 1, 0
        %v500 = vsel %vm496, 1, 0
        %v501 = vcvt.s32.f32 %v497
        %v502 = vcvt.s32.f32 %v498
        %v503 = vcvt.s32.f32 %v499
        %v504 = vcvt.s32.f32 %v500
        %s505 = scalar_lea.vmem %s262, 16 [#allocation7]
        %v506 = vld [vmem:[%s505] sm:$0xff]
        %v507 = vmul.f32 %v489, %v501
        %v508 = vmul.f32 %v490, %v502
        %v509 = vmul.f32 %v491, %v503
        %v510 = vmul.f32 %v492, %v504
        %v511 = vadd.f32 %v507, %v508
        %v512 = vadd.f32 %v511, %v509
        %v513 = vadd.f32 %v512, %v510
        %v514 = vadd.f32 %v506, %v513
        %515 = vst [vmem:[%s505] sm:$0xff] %v514
        %s516 = scalar_lea.vmem %s262, 48 [#allocation7]
        %v517 = vld [vmem:[%s516] sm:$0xff]
        %v518 = vadd.f32 %v489, %v490
        %v519 = vadd.f32 %v518, %v491
        %v520 = vadd.f32 %v519, %v492
        %v521 = vadd.f32 %v517, %v520
        %522 = vst [vmem:[%s516] sm:$0xff] %v521
        %s523 = scalar_lea.vmem %s262, 80 [#allocation7]
        %v524 = vld [vmem:[%s523] sm:$0xff]
        %v525 = vadd.f32 %v501, %v502
        %v526 = vadd.f32 %v525, %v503
        %v527 = vadd.f32 %v526, %v504
        %v528 = vadd.f32 %v524, %v527
        %529 = vst [vmem:[%s523] sm:$0xff] %v528
        %v530 = vmul.f32 %v389, %v404
        %v531 = vmul.f32 %v391, %v405
        %v532 = vmul.f32 %v393, %v406
        %v533 = vmul.f32 %v395, %v407
        %vm534 = vcmp.eq.s32.totalorder %v285, 3
        %vm535 = vcmp.eq.s32.totalorder %v286, 3
        %vm536 = vcmp.eq.s32.totalorder %v287, 3
        %vm537 = vcmp.eq.s32.totalorder %v288, 3
        %v538 = vsel %vm534, 1, 0
        %v539 = vsel %vm535, 1, 0
        %v540 = vsel %vm536, 1, 0
        %v541 = vsel %vm537, 1, 0
        %v542 = vcvt.s32.f32 %v538
        %v543 = vcvt.s32.f32 %v539
        %v544 = vcvt.s32.f32 %v540
        %v545 = vcvt.s32.f32 %v541
        %s546 = scalar_lea.vmem %s262, 24 [#allocation7]
        %v547 = vld [vmem:[%s546] sm:$0xff]
        %v548 = vmul.f32 %v530, %v542
        %v549 = vmul.f32 %v531, %v543
        %v550 = vmul.f32 %v532, %v544
        %v551 = vmul.f32 %v533, %v545
        %v552 = vadd.f32 %v548, %v549
        %v553 = vadd.f32 %v552, %v550
        %v554 = vadd.f32 %v553, %v551
        %v555 = vadd.f32 %v547, %v554
        %556 = vst [vmem:[%s546] sm:$0xff] %v555
        %s557 = scalar_lea.vmem %s262, 56 [#allocation7]
        %v558 = vld [vmem:[%s557] sm:$0xff]
        %v559 = vadd.f32 %v530, %v531
        %v560 = vadd.f32 %v559, %v532
        %v561 = vadd.f32 %v560, %v533
        %v562 = vadd.f32 %v558, %v561
        %563 = vst [vmem:[%s557] sm:$0xff] %v562
        %s564 = scalar_lea.vmem %s262, 88 [#allocation7]
        %v565 = vld [vmem:[%s564] sm:$0xff]
        %v566 = vadd.f32 %v542, %v543
        %v567 = vadd.f32 %v566, %v544
        %v568 = vadd.f32 %v567, %v545
        %v569 = vadd.f32 %v565, %v568
        %570 = vst [vmem:[%s564] sm:$0xff] %v569
        %s571 = sand.u32 %s111, 1
        %s572 = scalar_lea.sflag [#allocation4], %s571
        %s573 = sand.u32 %s111, 1
        %s574 = smul.addr %s573, 96
        %s575 = scalar_lea.vmem [#allocation7], %s574
        // Predicated region
        $region41: #{tpu_custom_call.1} parent=27 // pred_check
          %p576 = pneg %p121
        $region42: #{tpu_custom_call.1} parent=27 // pred_check_branch
          %578 = sbr.rel (%p576) target = $region44
        $region43: #{tpu_custom_call.1} parent=27 // pred_region
          %s580 = ssub.s32 1536, 1536
          %581 = vsyncadd %s572, %s580
          %s582 = smul.addr %s28, 12
          %s583 = smul.addr %s27, 12
          %s584 = sadd.s32 %s582, %s583
          %s585 = smul.addr %s584, 128
          %s586 = scalar_lea.hbm %s2, %s585
          %s587 = sshll.u32 %s575, 4
          %s588 = int_to_ptr.vmem [resolvable:$true] %s587
          %593 = dma.vmem_to_hbm [thread:$0]  %s588, 1536, %s586, %s572, 128, 128, 8
        $region44: #{tpu_custom_call.1} parent=27 // pred_fallthru
          _
      $region28: #{tpu_custom_call.1} parent=5 // pred_fallthru
        _
      %p594 = scmp.le.s32.totalorder 2, %s17
      // Predicated region
      $region45: #{tpu_custom_call.1} parent=5 // pred_check
        %p595 = pneg %p594
      $region46: #{tpu_custom_call.1} parent=5 // pred_check_branch
        %597 = sbr.rel (%p595) target = $region48
      $region47: #{tpu_custom_call.1} parent=5 // pred_region
        %s598 = ssub.s32 %s17, 2
        // Predicated region
        $region49: #{tpu_custom_call.1} parent=47 // pred_check
          %p599 = pneg %p127
        $region50: #{tpu_custom_call.1} parent=47 // pred_check_branch
          %601 = sbr.rel (%p599) target = $region52
        $region51: #{tpu_custom_call.1} parent=47 // pred_region
          %s602 = sand.u32 %s112, 1
          %s603 = scalar_lea.sflag [#allocation4], %s602
          %s604 = sand.u32 %s112, 1
          %s605 = smul.addr %s604, 96
          %s606 = scalar_lea.vmem [#allocation7], %s605
          %607 = dma.done %s603, 1536
        $region52: #{tpu_custom_call.1} parent=47 // pred_fallthru
          _
      $region48: #{tpu_custom_call.1} parent=5 // pred_fallthru
        _
    $region6: #{tpu_custom_call.1} parent=1 // loop_footer
      %s21 = sadd.s32 1, %s17
    $region7: #{tpu_custom_call.1} parent=1 // loop_footer_branch
      %16 = sbr.rel target = $region3
    $region8: #{tpu_custom_call.1} parent=1 // loop_exit
      _
    %608 = vsyncpa [#allocation3], 1
    %s609 = scalar_lea.sflag [#allocation3], 1
    %610 = vsyncpa %s609, 1
    %611 = vsyncpa [#allocation6], 1
    %s612 = scalar_lea.sflag [#allocation6], 1
    %613 = vsyncpa %s612, 1
    %614 = vsyncpa [#allocation4], 1
    %s615 = scalar_lea.sflag [#allocation4], 1
    %616 = vsyncpa %s615, 1

</llo_original>
